<compile_context>
chip_gen: v7x
topology: tpu7x:2x2x1
jax: 0.10.0
libtpu: 0.0.40
codegen_flags: <defaults>
</compile_context>

<pallas_src>
import math
import functools

import jax
import jax.numpy as jnp
from jax.experimental import pallas as pl
from jax.experimental.pallas import tpu as pltpu


def make_positional_encoding(max_len: int, d_model: int, dtype=jnp.float32):
    """Deterministic buffer identical to the PyTorch __init__ construction."""
    position = jnp.arange(max_len, dtype=jnp.float32)[:, None]              # (L, 1)
    div_term = jnp.exp(
        jnp.arange(0, d_model, 2, dtype=jnp.float32) * (-math.log(10000.0) / d_model)
    )                                                                       # (D/2,)
    pe = jnp.zeros((max_len, 1, d_model), dtype=jnp.float32)
    pe = pe.at[:, 0, 0::2].set(jnp.sin(position * div_term))
    pe = pe.at[:, 0, 1::2].set(jnp.cos(position * div_term))
    return pe.astype(dtype)


# --------------------------------------------------------------------------- #
# Kernels: blocks are (TILE_S, D) — S on sublanes, D on lanes.
# --------------------------------------------------------------------------- #
def _pe_add_kernel(x_ref, pe_ref, o_ref):
    # Pure streaming add; compute in f32, single cast at the store (v5e-friendly).
    y = x_ref[...].astype(jnp.float32) + pe_ref[...].astype(jnp.float32)
    o_ref[...] = y.astype(o_ref.dtype)


def _pe_add_dropout_kernel(x_ref, pe_ref, bits_ref, o_ref, *, threshold, inv_keep):
    y = x_ref[...].astype(jnp.float32) + pe_ref[...].astype(jnp.float32)
    keep = bits_ref[...] >= jnp.uint32(threshold)          # P(keep) = 1 - p
    o_ref[...] = jnp.where(keep, y * inv_keep, 0.0).astype(o_ref.dtype)


def _choose_tile_s(seq_len, d_model, n_streams, itemsize=4,
                   budget_bytes=24 * 1024 * 1024):
    """Largest sublane-aligned row tile whose double-buffered streams fit VMEM."""
    denom = 2 * n_streams * d_model * itemsize              # 2x = double buffering
    max_rows = max(int(budget_bytes // denom), 8)
    tile = min(seq_len, max_rows, 2048)
    if seq_len >= 8:
        tile = max((tile // 8) * 8, 8)
    return min(tile, seq_len)


def positional_encoding(x, pe, *, dropout_p: float = 0.1,
                        training: bool = False, rng_key=None):
    """x: (S, B, D) seq-first; pe: (max_len, 1, D) or (max_len, D)."""
    S, B, D = x.shape
    pe2d = jnp.squeeze(pe, axis=1) if pe.ndim == 3 else pe  # (max_len, D)

    # Layout plumbing: present lane-dense (TILE_S, D) blocks to the kernel.
    x_bsd = jnp.transpose(x, (1, 0, 2))                      # (B, S, D)

    apply_dropout = bool(training) and dropout_p > 0.0
    n_streams = 4 if apply_dropout else 3                    # x, out, pe (+ bits)
    tile_s = _choose_tile_s(S, D, n_streams)
    grid = (pl.cdiv(S, tile_s), B)                           # batch innermost:
                                                             # pe tile reused B times
    x_spec = pl.BlockSpec((None, tile_s, D), lambda s, b: (b, s, 0))
    pe_spec = pl.BlockSpec((tile_s, D), lambda s, b: (s, 0))

    if apply_dropout:
        if rng_key is None:
            rng_key = jax.random.PRNGKey(0)
        bits = jax.random.bits(rng_key, x_bsd.shape, dtype=jnp.uint32)
        threshold = min(int(round(dropout_p * (2 ** 32))), 2 ** 32 - 1)
        kernel = functools.partial(_pe_add_dropout_kernel,
                                   threshold=threshold,
                                   inv_keep=1.0 / (1.0 - dropout_p))
        in_specs = [x_spec, pe_spec, x_spec]
        args = (x_bsd, pe2d, bits)
    else:
        kernel = _pe_add_kernel
        in_specs = [x_spec, pe_spec]
        args = (x_bsd, pe2d)

    out_bsd = pl.pallas_call(
        kernel,
        out_shape=jax.ShapeDtypeStruct((B, S, D), x.dtype),
        grid=grid,
        in_specs=in_specs,
        out_specs=x_spec,
        compiler_params=pltpu.CompilerParams(
            dimension_semantics=("parallel", "parallel"),
            vmem_limit_bytes=48 * 1024 * 1024,
        ),
    )(*args)

    return jnp.transpose(out_bsd, (1, 0, 2))                 # back to (S, B, D)


if __name__ == "__main__":
    # Small shapes implied by the forward: seq-first (S, B, D)
    S, B, D = 8, 2, 32
    MAX_LEN = 64

    key = jax.random.PRNGKey(0)
    kx, kd = jax.random.split(key)
    x = jax.random.normal(kx, (S, B, D), dtype=jnp.float32)

    pe = make_positional_encoding(MAX_LEN, D, dtype=jnp.float32)

    # Eval-mode forward (dropout is identity): exact check against pure JAX.
    out = positional_encoding(x, pe, dropout_p=0.1, training=False)
    out = jax.block_until_ready(out)
    ref = x + pe[:S]
    assert out.shape == (S, B, D)
    assert jnp.allclose(out, ref, atol=1e-6, rtol=1e-6)

    # Training-mode forward: every element must be 0 (dropped) or ref/(1-p) (kept).
    p = 0.5
    out_tr = positional_encoding(x, pe, dropout_p=p, training=True, rng_key=kd)
    out_tr = jax.block_until_ready(out_tr)
    ref_scaled = ref / (1.0 - p)
    ok = jnp.logical_or(jnp.isclose(out_tr, 0.0, atol=1e-6),
                        jnp.isclose(out_tr, ref_scaled, atol=1e-5, rtol=1e-5))
    assert bool(jnp.all(ok))

    print("KERNEL_OK")
</pallas_src>

<mosaic_0001>
module attributes {stable_mosaic.version = 11 : i64} {
  func.func @_pe_add_kernel(%arg0: i32, %arg1: i32, %arg2: memref<1x8x32xf32, #tpu.memory_space<vmem>>, %arg3: memref<8x32xf32, #tpu.memory_space<vmem>>, %arg4: memref<1x8x32xf32, #tpu.memory_space<vmem>>) attributes {dimension_semantics = [#tpu.dimension_semantics<parallel>, #tpu.dimension_semantics<parallel>], iteration_bounds = array<i64: 1, 2>, scalar_prefetch = 0 : i64, scratch_operands = 0 : i64, tpu.core_type = #tpu.core_type<tc>, window_params = [{transform_indices = @transform_0, window_bounds = array<i64: 1, 8, 32>}, {transform_indices = @transform_1, window_bounds = array<i64: 8, 32>}, {transform_indices = @transform_2, window_bounds = array<i64: 1, 8, 32>}]} {
    %c0 = arith.constant 0 : index
    %c0_0 = arith.constant 0 : index
    %c0_1 = arith.constant 0 : index
    %0 = vector.load %arg2[%c0, %c0_0, %c0_1] : memref<1x8x32xf32, #tpu.memory_space<vmem>>, vector<1x8x32xf32>
    %1 = vector.shape_cast %0 : vector<1x8x32xf32> to vector<8x32xf32>
    %c0_2 = arith.constant 0 : index
    %c0_3 = arith.constant 0 : index
    %2 = vector.load %arg3[%c0_2, %c0_3] : memref<8x32xf32, #tpu.memory_space<vmem>>, vector<8x32xf32>
    %3 = arith.addf %1, %2 : vector<8x32xf32>
    %c0_4 = arith.constant 0 : index
    %c0_5 = arith.constant 0 : index
    %c0_6 = arith.constant 0 : index
    %4 = vector.load %arg4[%c0_4, %c0_5, %c0_6] : memref<1x8x32xf32, #tpu.memory_space<vmem>>, vector<1x8x32xf32>
    %5 = vector.shape_cast %4 : vector<1x8x32xf32> to vector<8x32xf32>
    %6 = vector.shape_cast %3 : vector<8x32xf32> to vector<1x8x32xf32>
    tpu.vector_store %arg4[%c0_4, %c0_5, %c0_6], %6 {strides = array<i32>} : memref<1x8x32xf32, #tpu.memory_space<vmem>>, vector<1x8x32xf32>,
    return
  }
  func.func @transform_0(%arg0: i32, %arg1: i32) -> (i32, i32, i32) {
    %c0_i32 = arith.constant 0 : i32
    %c0_i32_0 = arith.constant 0 : i32
    return %arg1, %arg0, %c0_i32 : i32, i32, i32
  }
  func.func @transform_1(%arg0: i32, %arg1: i32) -> (i32, i32) {
    %c0_i32 = arith.constant 0 : i32
    %c0_i32_0 = arith.constant 0 : i32
    return %arg0, %c0_i32 : i32, i32
  }
  func.func @transform_2(%arg0: i32, %arg1: i32) -> (i32, i32, i32) {
    %c0_i32 = arith.constant 0 : i32
    %c0_i32_0 = arith.constant 0 : i32
    return %arg1, %arg0, %c0_i32 : i32, i32, i32
  }
}

</mosaic_0001>

<llo_original>
// kernel: tpu_custom_call.1
$region0: #{tpu_custom_call.1}
  #allocation0 [shape = 'u32[]', space=smem, size = 0x4, offset = 0x4, fixed_abs, tag = 'smem constant byte address 0x4 - core index']
  #allocation1 [shape = 'u32[144,128]{1,0:T(1,128)}', space=vmem, size = 0x12000, scoped, tag = 'internal scratch']
  %s0 = inlined_call_operand.vmem [shape: f32[2,8,32], index: 0, kind: input, shape index: {}]
  %s1 = inlined_call_operand.vmem [shape: f32[64,32], index: 1, kind: input, shape index: {}]
  %s2 = inlined_call_operand.hbm [shape: f32[2,8,32], index: 2, kind: output, shape index: {}]
  %s3 = sld [smem:[#allocation0]]
  $region41: #{tpu_custom_call.1} parent=0
    _
  %s5 = ssub.s32 1, %s3
  %s6 = scalar_select 0, %s5, %s3
  $region1: #{tpu_custom_call.1} parent=0
    #allocation2 [shape = 'u8[8192]{0}', space=vmem, size = 0x2000, scoped, tag = 'output window, operand 0']
    #allocation3 [shape = 's32[2]{0}', space=sflag, size = 0x8, scoped, tag = 'scoped memory for tpu_custom_call.1']
    %7 = vsyncpa [#allocation3], 0
    %s8 = scalar_lea.sflag [#allocation3], 1
    %9 = vsyncpa %s8, 0
    loop: start=0, step=1, limit=4
    $region2: #{tpu_custom_call.1} parent=1 // loop_pre_header
      _
    $region3: #{tpu_custom_call.1} parent=1 // loop_header
      %s11 = sphi 0, %s15
      %p12 = scmp.ge.s32.totalorder %s11, 4
      %s18 = sphi 0, %s30
      %s19 = sphi 0, %s26
      %s20 = sphi 0, %s18
      %s21 = sphi 0, %s19
      %s22 = sphi 0, %s20
      %s23 = sphi 0, %s21
      %s35 = sphi 0, %s37
      %s38 = sphi 0, %s35
      %s39 = sphi 0, %s38
      %s55 = sphi 0, %s39
      %s61 = sphi 0, %s63
      %s64 = sphi 0, %s61
      %s65 = sphi 0, %s64
      %s81 = sphi 0, %s65
      %s89 = sphi 0, %s91
      %s92 = sphi 0, %s89
      %s93 = sphi 0, %s92
      %s109 = sphi 0, %s93
    $region4: #{tpu_custom_call.1} parent=1 // loop_header_branch
      %14 = sbr.rel (%p12) target = $region8
    $region5: #{tpu_custom_call.1} parent=1 // loop_body
      %s16 = ssub.s32 %s11, 1
      %s17 = ssub.s32 %s11, 2
      %s24 = sadd.s32 1, %s19
      %p25 = scmp.ge.s32.totalorder %s24, 2
      %s26 = scalar_select %p25, 0, %s24
      %s27 = sadd.s32 1, %s18
      %s28 = scalar_select %p25, %s27, %s18
      %p29 = scmp.ge.s32.totalorder %s28, 1
      %s30 = scalar_select %p29, 0, %s28
      %s31 = ssub.s32 %s19, %s26
      %s32 = ssub.s32 %s18, %s30
      %s33 = sor.u32 %s31, %s32
      %p34 = scmp.eq.s32.totalorder %s33, 0
      %s36 = sadd.s32 %s35, 1
      %s37 = scalar_select %p34, %s35, %s36
      %p40 = pneg %p34
      %p41 = scmp.eq.s32.totalorder %s11, 1
      %p42 = por %p40, %p41
      %p43 = scmp.ne.s32.totalorder %s35, %s38
      %p44 = scmp.eq.s32.totalorder %s11, 0
      %p45 = por %p43, %p44
      %p46 = scmp.ne.s32.totalorder %s35, %s38
      %p47 = scmp.eq.s32.totalorder %s16, 1
      %p48 = por %p46, %p47
      %p49 = scmp.ne.s32.totalorder %s38, %s39
      %p50 = scmp.eq.s32.totalorder %s16, 0
      %p51 = por %p49, %p50
      %p52 = scmp.ne.s32.totalorder %s38, %s39
      %p53 = scmp.eq.s32.totalorder %s17, 1
      %p54 = por %p52, %p53
      %p56 = scmp.ne.s32.totalorder %s39, %s55
      %p57 = scmp.eq.s32.totalorder %s17, 0
      %p58 = por %p56, %p57
      %s59 = ssub.s32 %s18, %s30
      %p60 = scmp.eq.s32.totalorder %s59, 0
      %s62 = sadd.s32 %s61, 1
      %s63 = scalar_select %p60, %s61, %s62
      %p66 = pneg %p60
      %p67 = scmp.eq.s32.totalorder %s11, 1
      %p68 = por %p66, %p67
      %p69 = scmp.ne.s32.totalorder %s61, %s64
      %p70 = scmp.eq.s32.totalorder %s11, 0
      %p71 = por %p69, %p70
      %p72 = scmp.ne.s32.totalorder %s61, %s64
      %p73 = scmp.eq.s32.totalorder %s16, 1
      %p74 = por %p72, %p73
      %p75 = scmp.ne.s32.totalorder %s64, %s65
      %p76 = scmp.eq.s32.totalorder %s16, 0
      %p77 = por %p75, %p76
      %p78 = scmp.ne.s32.totalorder %s64, %s65
      %p79 = scmp.eq.s32.totalorder %s17, 1
      %p80 = por %p78, %p79
      %p82 = scmp.ne.s32.totalorder %s65, %s81
      %p83 = scmp.eq.s32.totalorder %s17, 0
      %p84 = por %p82, %p83
      %s85 = ssub.s32 %s19, %s26
      %s86 = ssub.s32 %s18, %s30
      %s87 = sor.u32 %s85, %s86
      %p88 = scmp.eq.s32.totalorder %s87, 0
      %s90 = sadd.s32 %s89, 1
      %s91 = scalar_select %p88, %s89, %s90
      %p94 = pneg %p88
      %p95 = scmp.eq.s32.totalorder %s11, 1
      %p96 = por %p94, %p95
      %p97 = scmp.ne.s32.totalorder %s89, %s92
      %p98 = scmp.eq.s32.totalorder %s11, 0
      %p99 = por %p97, %p98
      %p100 = scmp.ne.s32.totalorder %s89, %s92
      %p101 = scmp.eq.s32.totalorder %s16, 1
      %p102 = por %p100, %p101
      %p103 = scmp.ne.s32.totalorder %s92, %s93
      %p104 = scmp.eq.s32.totalorder %s16, 0
      %p105 = por %p103, %p104
      %p106 = scmp.ne.s32.totalorder %s92, %s93
      %p107 = scmp.eq.s32.totalorder %s17, 1
      %p108 = por %p106, %p107
      %p110 = scmp.ne.s32.totalorder %s93, %s109
      %p111 = scmp.eq.s32.totalorder %s17, 0
      %p112 = por %p110, %p111
      %p113 = scmp.le.s32.totalorder 1, %s11
      %p114 = scmp.lt.s32.totalorder %s11, 3
      %p115 = pnand %p113, %p114
      %p116 = pneg %p115
      // Predicated region
      $region9: #{tpu_custom_call.1} parent=5 // pred_check
        _
      $region10: #{tpu_custom_call.1} parent=5 // pred_check_branch
        %118 = sbr.rel (%p115) target = $region12
      $region11: #{tpu_custom_call.1} parent=5 // pred_region
        %s119 = ssub.s32 %s11, 1
        // Predicated region
        $region13: #{tpu_custom_call.1} parent=11 // pred_check
          %p120 = pneg %p77
        $region14: #{tpu_custom_call.1} parent=11 // pred_check_branch
          %122 = sbr.rel (%p120) target = $region16
        $region15: #{tpu_custom_call.1} parent=11 // pred_region
          %p123 = scmp.lt.s32.totalorder %s20, 7
          %s124 = scalar_select %p123, %s20, 7
          %s125 = smul.addr %s124, 8
          %s126 = scalar_lea.vmem %s1, %s125
        $region16: #{tpu_custom_call.1} parent=11 // pred_fallthru
          _
      $region12: #{tpu_custom_call.1} parent=5 // pred_fallthru
        _
      %p127 = scmp.lt.s32.totalorder %s11, 2
      // Predicated region
      $region17: #{tpu_custom_call.1} parent=5 // pred_check
        %p128 = pneg %p127
      $region18: #{tpu_custom_call.1} parent=5 // pred_check_branch
        %130 = sbr.rel (%p128) target = $region20
      $region19: #{tpu_custom_call.1} parent=5 // pred_region
        // Predicated region
        $region21: #{tpu_custom_call.1} parent=19 // pred_check
          %p131 = pneg %p45
        $region22: #{tpu_custom_call.1} parent=19 // pred_check_branch
          %133 = sbr.rel (%p131) target = $region24
        $region23: #{tpu_custom_call.1} parent=19 // pred_region
          %p134 = scmp.lt.s32.totalorder %s19, 1
          %s135 = scalar_select %p134, %s19, 1
          %p136 = scmp.lt.s32.totalorder %s18, 0
          %s137 = scalar_select %p136, %s18, 0
          %s138 = sadd.s32 %s137, %s135
          %s139 = smul.addr %s138, 8
          %s140 = scalar_lea.vmem %s0, %s139
        $region24: #{tpu_custom_call.1} parent=19 // pred_fallthru
          _
      $region20: #{tpu_custom_call.1} parent=5 // pred_fallthru
        _
      %p141 = scmp.le.s32.totalorder 1, %s11
      %p142 = scmp.lt.s32.totalorder %s11, 3
      %p143 = pnand %p141, %p142
      %p144 = pneg %p143
      // Predicated region
      $region25: #{tpu_custom_call.1} parent=5 // pred_check
        _
      $region26: #{tpu_custom_call.1} parent=5 // pred_check_branch
        %146 = sbr.rel (%p143) target = $region28
      $region27: #{tpu_custom_call.1} parent=5 // pred_region
        %s147 = ssub.s32 %s11, 1
        %p148 = scmp.lt.s32.totalorder %s21, 1
        %s149 = scalar_select %p148, %s21, 1
        %p150 = scmp.lt.s32.totalorder %s20, 0
        %s151 = scalar_select %p150, %s20, 0
        %s152 = sadd.s32 %s151, %s149
        %s153 = smul.addr %s152, 8
        %s154 = scalar_lea.vmem %s0, %s153
        %p155 = pneg %p51
        %p156 = pneg %p48
        %p157 = scmp.lt.s32.totalorder %s20, 7
        %s158 = scalar_select %p157, %s20, 7
        %s159 = smul.addr %s158, 8
        %s160 = scalar_lea.vmem %s1, %s159
        %p161 = pneg %p77
        %p162 = pneg %p74
        %p163 = pneg %p105
        %p164 = pneg %p102
        %s165 = sand.u32 %s92, 1
        %s166 = scalar_lea.sflag [#allocation3], %s165
        %s167 = sand.u32 %s92, 1
        %s168 = smul.addr %s167, 8
        %s169 = scalar_lea.vmem [#allocation2], %s168
        %p170 = scmp.lt.s32.totalorder %s21, 1
        %s171 = scalar_select %p170, %s21, 1
        %p172 = scmp.lt.s32.totalorder %s20, 0
        %s173 = scalar_select %p172, %s20, 0
        %s174 = sadd.s32 %s173, %s171
        %s175 = smul.addr %s174, 8
        %s176 = scalar_lea.vmem %s0, %s175
        %p177 = scmp.lt.s32.totalorder %s20, 7
        %s178 = scalar_select %p177, %s20, 7
        %s179 = smul.addr %s178, 8
        %s180 = scalar_lea.vmem %s1, %s179
        %v181 = vld [vmem:[%s176] sm:$0xff]
        %v182 = vld [vmem:[%s180] sm:$0xff]
        %v183 = vadd.f32 %v181, %v182
        %vm184 = vcmask 261120
        %185 = vst.msk [vmem:[%s169] sm:$0xff] %vm184, %v183
        %s186 = sand.u32 %s92, 1
        %s187 = scalar_lea.sflag [#allocation3], %s186
        %s188 = sand.u32 %s92, 1
        %s189 = smul.addr %s188, 8
        %s190 = scalar_lea.vmem [#allocation2], %s189
        // Predicated region
        $region29: #{tpu_custom_call.1} parent=27 // pred_check
          %p191 = pneg %p102
        $region30: #{tpu_custom_call.1} parent=27 // pred_check_branch
          %193 = sbr.rel (%p191) target = $region32
        $region31: #{tpu_custom_call.1} parent=27 // pred_region
          %s195 = ssub.s32 128, 128
          %196 = vsyncadd %s187, %s195
          %s197 = sadd.s32 %s20, %s21
          %s198 = smul.addr %s197, 128
          %s199 = scalar_lea.hbm %s2, %s198
          %s201 = sshll.u32 %s190, 4
          %s202 = int_to_ptr.vmem [resolvable:$true] %s201
          %204 = dma.vmem_to_hbm [thread:$0]  %s202, 128, %s199, %s187
        $region32: #{tpu_custom_call.1} parent=27 // pred_fallthru
          _
      $region28: #{tpu_custom_call.1} parent=5 // pred_fallthru
        _
      %p205 = scmp.le.s32.totalorder 2, %s11
      // Predicated region
      $region33: #{tpu_custom_call.1} parent=5 // pred_check
        %p206 = pneg %p205
      $region34: #{tpu_custom_call.1} parent=5 // pred_check_branch
        %208 = sbr.rel (%p206) target = $region36
      $region35: #{tpu_custom_call.1} parent=5 // pred_region
        %s209 = ssub.s32 %s11, 2
        // Predicated region
        $region37: #{tpu_custom_call.1} parent=35 // pred_check
          %p210 = pneg %p108
        $region38: #{tpu_custom_call.1} parent=35 // pred_check_branch
          %212 = sbr.rel (%p210) target = $region40
        $region39: #{tpu_custom_call.1} parent=35 // pred_region
          %s213 = sand.u32 %s93, 1
          %s214 = scalar_lea.sflag [#allocation3], %s213
          %s215 = sand.u32 %s93, 1
          %s216 = smul.addr %s215, 8
          %s217 = scalar_lea.vmem [#allocation2], %s216
          %218 = dma.done %s214, 128
        $region40: #{tpu_custom_call.1} parent=35 // pred_fallthru
          _
      $region36: #{tpu_custom_call.1} parent=5 // pred_fallthru
        _
    $region6: #{tpu_custom_call.1} parent=1 // loop_footer
      %s15 = sadd.s32 1, %s11
    $region7: #{tpu_custom_call.1} parent=1 // loop_footer_branch
      %10 = sbr.rel target = $region3
    $region8: #{tpu_custom_call.1} parent=1 // loop_exit
      _
    %219 = vsyncpa [#allocation3], 1
    %s220 = scalar_lea.sflag [#allocation3], 1
    %221 = vsyncpa %s220, 1

</llo_original>
